<compile_context>
chip_gen: v5e
topology: v5e:2x2
jax: 0.10.0
libtpu: 0.0.40
codegen_flags: <defaults>
</compile_context>

<pallas_src>
import functools

import jax
import jax.numpy as jnp
import numpy as np
from jax.experimental import pallas as pl
from jax.experimental.pallas import tpu as pltpu


def _res_layer_kernel(x1col_ref, xres_ref, w1_ref, w2_ref, b1_ref, b2_ref,
                      o_ref, *, ks, pad, L):
    # ---- conv1: one GEMM on the wrapper-built im2col (rows ordered ci*ks+k).
    h = jnp.dot(w1_ref[...], x1col_ref[...],
                preferred_element_type=jnp.float32)            # (C, NLp)
    h = jnp.maximum(h + b1_ref[...], 0.0)                      # bias + ReLU

    C, NLp = h.shape

    # ---- conv2: build im2col of h in registers via lane rotations + masks.
    # Column layout is [batch-block n | position l], block length L. For tap k the
    # operand is h[:, col + (k - pad)], valid only while staying inside the same
    # batch block ('same' zero-padding); out-of-block lanes are zeroed.
    lane = jax.lax.broadcasted_iota(jnp.int32, (C, NLp), 1) % L
    blocks = []
    for k in range(ks):                                        # static unroll
        s = pad - k
        if s == 0:
            blocks.append(h)
            continue
        rolled = pltpu.roll(h, shift=s % NLp, axis=1)          # XLU rotate
        if s > 0:
            valid = lane >= s                                  # l + k - pad >= 0
        else:
            valid = lane < L + s                               # l + k - pad < L
        blocks.append(jnp.where(valid, rolled, 0.0))
    h2 = jnp.concatenate(blocks, axis=0)                       # (ks*C, NLp), k-major

    out = jnp.dot(w2_ref[...], h2, preferred_element_type=jnp.float32)
    out = out + b2_ref[...] + xres_ref[...]                    # bias + residual
    o_ref[...] = jnp.maximum(out, 0.0).astype(o_ref.dtype)     # final ReLU


def res_layer(x, w1, b1, w2, b2):
    """x: (N, C, L); w*: (C_out, C_in, ks) PyTorch Conv1d layout; b*: (C,)."""
    N, C, L = x.shape
    ks = w1.shape[-1]
    pad = (ks - 1) // 2
    NL = N * L
    NLp = ((NL + 127) // 128) * 128        # lane-dense (multiple of 128)

    # Lane-dense activation layout: fold batch into lanes -> (C, N*L).
    x_flat = jnp.transpose(x, (1, 0, 2)).reshape(C, NL)
    x_flat = jnp.pad(x_flat, ((0, 0), (0, NLp - NL)))

    # Wrapper-side im2col of x for conv1: rows ordered (ci, k) -> ci*ks + k.
    x_pad = jnp.pad(x, ((0, 0), (0, 0), (pad, pad)))           # (N, C, L+2*pad)
    taps = jnp.stack([x_pad[:, :, k:k + L] for k in range(ks)], axis=0)  # (ks,N,C,L)
    x1col = jnp.transpose(taps, (2, 0, 1, 3)).reshape(C * ks, NL)
    x1col = jnp.pad(x1col, ((0, 0), (0, NLp - NL)))

    # Weights flattened to match the im2col row orders:
    #   conv1: columns ci*ks + k (PyTorch (Co,Ci,ks) row-major reshape)
    #   conv2: columns k*C + ci  (k-major, matching the in-kernel concat order)
    w1_flat = w1.reshape(C, C * ks)
    w2_flat = jnp.transpose(w2, (0, 2, 1)).reshape(C, ks * C)

    # Biases pre-broadcast lane-dense so the kernel only adds.
    b1_b = jnp.broadcast_to(b1[:, None], (C, NLp)).astype(jnp.float32)
    b2_b = jnp.broadcast_to(b2[:, None], (C, NLp)).astype(jnp.float32)

    kernel = functools.partial(_res_layer_kernel, ks=ks, pad=pad, L=L)

    out_flat = pl.pallas_call(
        kernel,
        out_shape=jax.ShapeDtypeStruct((C, NLp), x.dtype),
        grid=(1,),
        in_specs=[
            pl.BlockSpec((C * ks, NLp), lambda i: (0, 0)),   # im2col(x)
            pl.BlockSpec((C, NLp), lambda i: (0, 0)),        # residual x (flat)
            pl.BlockSpec((C, C * ks), lambda i: (0, 0)),     # w1 flat
            pl.BlockSpec((C, ks * C), lambda i: (0, 0)),     # w2 flat (k-major)
            pl.BlockSpec((C, NLp), lambda i: (0, 0)),        # b1 broadcast
            pl.BlockSpec((C, NLp), lambda i: (0, 0)),        # b2 broadcast
        ],
        out_specs=pl.BlockSpec((C, NLp), lambda i: (0, 0)),
        compiler_params=pltpu.CompilerParams(
            dimension_semantics=("arbitrary",)),
    )(x1col, x_flat, w1_flat, w2_flat, b1_b, b2_b)

    out = out_flat[:, :NL].reshape(C, N, L)
    return jnp.transpose(out, (1, 0, 2))                     # back to (N, C, L)


def ref_forward(x, w1, b1, w2, b2):
    """Pure-JAX reference matching PyTorch semantics."""
    pad = (w1.shape[-1] - 1) // 2
    dn = ('NCH', 'OIH', 'NCH')
    h = jax.lax.conv_general_dilated(x, w1, (1,), [(pad, pad)],
                                     dimension_numbers=dn)
    h = jnp.maximum(h + b1[None, :, None], 0.0)
    h2 = jax.lax.conv_general_dilated(h, w2, (1,), [(pad, pad)],
                                      dimension_numbers=dn)
    h2 = h2 + b2[None, :, None]
    return jnp.maximum(h2 + x, 0.0)


if __name__ == "__main__":
    N, C, L, KS = 2, 8, 64, 15          # planes=8, seq len 64 -> N*L = 128 lanes
    key = jax.random.PRNGKey(0)
    kx, k1, k2, k3, k4 = jax.random.split(key, 5)

    # Deterministic parameter init (PyTorch Conv1d default-style uniform bound).
    bound = 1.0 / np.sqrt(C * KS)
    x = jax.random.normal(kx, (N, C, L), dtype=jnp.float32)
    w1 = jax.random.uniform(k1, (C, C, KS), jnp.float32, -bound, bound)
    b1 = jax.random.uniform(k2, (C,), jnp.float32, -bound, bound)
    w2 = jax.random.uniform(k3, (C, C, KS), jnp.float32, -bound, bound)
    b2 = jax.random.uniform(k4, (C,), jnp.float32, -bound, bound)

    out = res_layer(x, w1, b1, w2, b2)
    jax.block_until_ready(out)

    ref = ref_forward(x, w1, b1, w2, b2)
    np.testing.assert_allclose(np.asarray(out), np.asarray(ref),
                               rtol=1e-4, atol=1e-4)
    print("KERNEL_OK")
</pallas_src>

<mosaic_0001>
module attributes {stable_mosaic.version = 11 : i64} {
  func.func @_res_layer_kernel(%arg0: i32, %arg1: memref<120x128xf32, #tpu.memory_space<vmem>>, %arg2: memref<8x128xf32, #tpu.memory_space<vmem>>, %arg3: memref<8x120xf32, #tpu.memory_space<vmem>>, %arg4: memref<8x120xf32, #tpu.memory_space<vmem>>, %arg5: memref<8x128xf32, #tpu.memory_space<vmem>>, %arg6: memref<8x128xf32, #tpu.memory_space<vmem>>, %arg7: memref<8x128xf32, #tpu.memory_space<vmem>>) attributes {dimension_semantics = [#tpu.dimension_semantics<arbitrary>], iteration_bounds = array<i64: 1>, scalar_prefetch = 0 : i64, scratch_operands = 0 : i64, tpu.core_type = #tpu.core_type<tc>, window_params = [{pipeline_mode = #tpu.pipeline_mode<synchronous>, transform_indices = @transform_0, window_bounds = array<i64: 120, 128>}, {pipeline_mode = #tpu.pipeline_mode<synchronous>, transform_indices = @transform_1, window_bounds = array<i64: 8, 128>}, {pipeline_mode = #tpu.pipeline_mode<synchronous>, transform_indices = @transform_2, window_bounds = array<i64: 8, 120>}, {pipeline_mode = #tpu.pipeline_mode<synchronous>, transform_indices = @transform_3, window_bounds = array<i64: 8, 120>}, {pipeline_mode = #tpu.pipeline_mode<synchronous>, transform_indices = @transform_4, window_bounds = array<i64: 8, 128>}, {pipeline_mode = #tpu.pipeline_mode<synchronous>, transform_indices = @transform_5, window_bounds = array<i64: 8, 128>}, {pipeline_mode = #tpu.pipeline_mode<synchronous>, transform_indices = @transform_6, window_bounds = array<i64: 8, 128>}]} {
    %c0 = arith.constant 0 : index
    %c0_0 = arith.constant 0 : index
    %0 = vector.load %arg3[%c0, %c0_0] : memref<8x120xf32, #tpu.memory_space<vmem>>, vector<8x120xf32>
    %c0_1 = arith.constant 0 : index
    %c0_2 = arith.constant 0 : index
    %1 = vector.load %arg1[%c0_1, %c0_2] : memref<120x128xf32, #tpu.memory_space<vmem>>, vector<120x128xf32>
    %cst = arith.constant dense<0.000000e+00> : vector<8x128xf32>
    %2 = tpu.matmul %0, %1, %cst {dimension_numbers = #tpu.dot_dimension_numbers<[1], [0], [0], [1], [0, 0, 1, 1], [], []>} : vector<8x120xf32>, vector<120x128xf32>, vector<8x128xf32> -> vector<8x128xf32>
    %c0_3 = arith.constant 0 : index
    %c0_4 = arith.constant 0 : index
    %3 = vector.load %arg5[%c0_3, %c0_4] : memref<8x128xf32, #tpu.memory_space<vmem>>, vector<8x128xf32>
    %4 = arith.addf %2, %3 : vector<8x128xf32>
    %cst_5 = arith.constant 0.000000e+00 : f32
    %5 = vector.broadcast %cst_5 : f32 to vector<8x128xf32>
    %6 = arith.maximumf %4, %5 : vector<8x128xf32>
    %7 = tpu.iota {dimensions = array<i32: 1>} : vector<8x128xi32>
    %c64_i32 = arith.constant 64 : i32
    %c0_i32 = arith.constant 0 : i32
    %8 = arith.cmpi eq, %c64_i32, %c0_i32 : i32
    %c1_i32 = arith.constant 1 : i32
    %9 = arith.select %8, %c1_i32, %c64_i32 : i32
    %10 = vector.broadcast %9 : i32 to vector<8x128xi32>
    %11 = arith.remsi %7, %10 : vector<8x128xi32>
    %c0_i32_6 = arith.constant 0 : i32
    %12 = vector.broadcast %c0_i32_6 : i32 to vector<8x128xi32>
    %13 = arith.cmpi ne, %11, %12 : vector<8x128xi32>
    %c0_i32_7 = arith.constant 0 : i32
    %14 = vector.broadcast %c0_i32_7 : i32 to vector<8x128xi32>
    %15 = arith.cmpi slt, %11, %14 : vector<8x128xi32>
    %c0_i32_8 = arith.constant 0 : i32
    %16 = arith.cmpi slt, %9, %c0_i32_8 : i32
    %17 = vector.broadcast %16 : i1 to vector<8x128xi1>
    %18 = vector.broadcast %17 : vector<8x128xi1> to vector<8x128xi1>
    %19 = arith.xori %15, %18 : vector<8x128xi1>
    %20 = arith.andi %19, %13 : vector<8x128xi1>
    %21 = vector.broadcast %9 : i32 to vector<8x128xi32>
    %22 = arith.addi %11, %21 : vector<8x128xi32>
    %23 = arith.select %20, %22, %11 : vector<8x128xi1>, vector<8x128xi32>
    %c7_i32 = arith.constant 7 : i32
    %24 = tpu.dynamic_rotate %6 by %c7_i32 dim 1 : vector<8x128xf32>, i32 -> vector<8x128xf32>
    %c7_i32_9 = arith.constant 7 : i32
    %25 = vector.broadcast %c7_i32_9 : i32 to vector<8x128xi32>
    %26 = arith.cmpi sge, %23, %25 : vector<8x128xi32>
    %cst_10 = arith.constant 0.000000e+00 : f32
    %27 = vector.broadcast %cst_10 : f32 to vector<8x128xf32>
    %28 = arith.select %26, %24, %27 : vector<8x128xi1>, vector<8x128xf32>
    %c6_i32 = arith.constant 6 : i32
    %29 = tpu.dynamic_rotate %6 by %c6_i32 dim 1 : vector<8x128xf32>, i32 -> vector<8x128xf32>
    %c6_i32_11 = arith.constant 6 : i32
    %30 = vector.broadcast %c6_i32_11 : i32 to vector<8x128xi32>
    %31 = arith.cmpi sge, %23, %30 : vector<8x128xi32>
    %cst_12 = arith.constant 0.000000e+00 : f32
    %32 = vector.broadcast %cst_12 : f32 to vector<8x128xf32>
    %33 = arith.select %31, %29, %32 : vector<8x128xi1>, vector<8x128xf32>
    %c5_i32 = arith.constant 5 : i32
    %34 = tpu.dynamic_rotate %6 by %c5_i32 dim 1 : vector<8x128xf32>, i32 -> vector<8x128xf32>
    %c5_i32_13 = arith.constant 5 : i32
    %35 = vector.broadcast %c5_i32_13 : i32 to vector<8x128xi32>
    %36 = arith.cmpi sge, %23, %35 : vector<8x128xi32>
    %cst_14 = arith.constant 0.000000e+00 : f32
    %37 = vector.broadcast %cst_14 : f32 to vector<8x128xf32>
    %38 = arith.select %36, %34, %37 : vector<8x128xi1>, vector<8x128xf32>
    %c4_i32 = arith.constant 4 : i32
    %39 = tpu.dynamic_rotate %6 by %c4_i32 dim 1 : vector<8x128xf32>, i32 -> vector<8x128xf32>
    %c4_i32_15 = arith.constant 4 : i32
    %40 = vector.broadcast %c4_i32_15 : i32 to vector<8x128xi32>
    %41 = arith.cmpi sge, %23, %40 : vector<8x128xi32>
    %cst_16 = arith.constant 0.000000e+00 : f32
    %42 = vector.broadcast %cst_16 : f32 to vector<8x128xf32>
    %43 = arith.select %41, %39, %42 : vector<8x128xi1>, vector<8x128xf32>
    %c3_i32 = arith.constant 3 : i32
    %44 = tpu.dynamic_rotate %6 by %c3_i32 dim 1 : vector<8x128xf32>, i32 -> vector<8x128xf32>
    %c3_i32_17 = arith.constant 3 : i32
    %45 = vector.broadcast %c3_i32_17 : i32 to vector<8x128xi32>
    %46 = arith.cmpi sge, %23, %45 : vector<8x128xi32>
    %cst_18 = arith.constant 0.000000e+00 : f32
    %47 = vector.broadcast %cst_18 : f32 to vector<8x128xf32>
    %48 = arith.select %46, %44, %47 : vector<8x128xi1>, vector<8x128xf32>
    %c2_i32 = arith.constant 2 : i32
    %49 = tpu.dynamic_rotate %6 by %c2_i32 dim 1 : vector<8x128xf32>, i32 -> vector<8x128xf32>
    %c2_i32_19 = arith.constant 2 : i32
    %50 = vector.broadcast %c2_i32_19 : i32 to vector<8x128xi32>
    %51 = arith.cmpi sge, %23, %50 : vector<8x128xi32>
    %cst_20 = arith.constant 0.000000e+00 : f32
    %52 = vector.broadcast %cst_20 : f32 to vector<8x128xf32>
    %53 = arith.select %51, %49, %52 : vector<8x128xi1>, vector<8x128xf32>
    %c1_i32_21 = arith.constant 1 : i32
    %54 = tpu.dynamic_rotate %6 by %c1_i32_21 dim 1 : vector<8x128xf32>, i32 -> vector<8x128xf32>
    %c1_i32_22 = arith.constant 1 : i32
    %55 = vector.broadcast %c1_i32_22 : i32 to vector<8x128xi32>
    %56 = arith.cmpi sge, %23, %55 : vector<8x128xi32>
    %cst_23 = arith.constant 0.000000e+00 : f32
    %57 = vector.broadcast %cst_23 : f32 to vector<8x128xf32>
    %58 = arith.select %56, %54, %57 : vector<8x128xi1>, vector<8x128xf32>
    %c127_i32 = arith.constant 127 : i32
    %59 = tpu.dynamic_rotate %6 by %c127_i32 dim 1 : vector<8x128xf32>, i32 -> vector<8x128xf32>
    %c63_i32 = arith.constant 63 : i32
    %60 = vector.broadcast %c63_i32 : i32 to vector<8x128xi32>
    %61 = arith.cmpi slt, %23, %60 : vector<8x128xi32>
    %cst_24 = arith.constant 0.000000e+00 : f32
    %62 = vector.broadcast %cst_24 : f32 to vector<8x128xf32>
    %63 = arith.select %61, %59, %62 : vector<8x128xi1>, vector<8x128xf32>
    %c126_i32 = arith.constant 126 : i32
    %64 = tpu.dynamic_rotate %6 by %c126_i32 dim 1 : vector<8x128xf32>, i32 -> vector<8x128xf32>
    %c62_i32 = arith.constant 62 : i32
    %65 = vector.broadcast %c62_i32 : i32 to vector<8x128xi32>
    %66 = arith.cmpi slt, %23, %65 : vector<8x128xi32>
    %cst_25 = arith.constant 0.000000e+00 : f32
    %67 = vector.broadcast %cst_25 : f32 to vector<8x128xf32>
    %68 = arith.select %66, %64, %67 : vector<8x128xi1>, vector<8x128xf32>
    %c125_i32 = arith.constant 125 : i32
    %69 = tpu.dynamic_rotate %6 by %c125_i32 dim 1 : vector<8x128xf32>, i32 -> vector<8x128xf32>
    %c61_i32 = arith.constant 61 : i32
    %70 = vector.broadcast %c61_i32 : i32 to vector<8x128xi32>
    %71 = arith.cmpi slt, %23, %70 : vector<8x128xi32>
    %cst_26 = arith.constant 0.000000e+00 : f32
    %72 = vector.broadcast %cst_26 : f32 to vector<8x128xf32>
    %73 = arith.select %71, %69, %72 : vector<8x128xi1>, vector<8x128xf32>
    %c124_i32 = arith.constant 124 : i32
    %74 = tpu.dynamic_rotate %6 by %c124_i32 dim 1 : vector<8x128xf32>, i32 -> vector<8x128xf32>
    %c60_i32 = arith.constant 60 : i32
    %75 = vector.broadcast %c60_i32 : i32 to vector<8x128xi32>
    %76 = arith.cmpi slt, %23, %75 : vector<8x128xi32>
    %cst_27 = arith.constant 0.000000e+00 : f32
    %77 = vector.broadcast %cst_27 : f32 to vector<8x128xf32>
    %78 = arith.select %76, %74, %77 : vector<8x128xi1>, vector<8x128xf32>
    %c123_i32 = arith.constant 123 : i32
    %79 = tpu.dynamic_rotate %6 by %c123_i32 dim 1 : vector<8x128xf32>, i32 -> vector<8x128xf32>
    %c59_i32 = arith.constant 59 : i32
    %80 = vector.broadcast %c59_i32 : i32 to vector<8x128xi32>
    %81 = arith.cmpi slt, %23, %80 : vector<8x128xi32>
    %cst_28 = arith.constant 0.000000e+00 : f32
    %82 = vector.broadcast %cst_28 : f32 to vector<8x128xf32>
    %83 = arith.select %81, %79, %82 : vector<8x128xi1>, vector<8x128xf32>
    %c122_i32 = arith.constant 122 : i32
    %84 = tpu.dynamic_rotate %6 by %c122_i32 dim 1 : vector<8x128xf32>, i32 -> vector<8x128xf32>
    %c58_i32 = arith.constant 58 : i32
    %85 = vector.broadcast %c58_i32 : i32 to vector<8x128xi32>
    %86 = arith.cmpi slt, %23, %85 : vector<8x128xi32>
    %cst_29 = arith.constant 0.000000e+00 : f32
    %87 = vector.broadcast %cst_29 : f32 to vector<8x128xf32>
    %88 = arith.select %86, %84, %87 : vector<8x128xi1>, vector<8x128xf32>
    %c121_i32 = arith.constant 121 : i32
    %89 = tpu.dynamic_rotate %6 by %c121_i32 dim 1 : vector<8x128xf32>, i32 -> vector<8x128xf32>
    %c57_i32 = arith.constant 57 : i32
    %90 = vector.broadcast %c57_i32 : i32 to vector<8x128xi32>
    %91 = arith.cmpi slt, %23, %90 : vector<8x128xi32>
    %cst_30 = arith.constant 0.000000e+00 : f32
    %92 = vector.broadcast %cst_30 : f32 to vector<8x128xf32>
    %93 = arith.select %91, %89, %92 : vector<8x128xi1>, vector<8x128xf32>
    %94 = tpu.concatenate %28, %33, %38, %43, %48, %53, %58, %6, %63, %68, %73, %78, %83, %88, %93 in 0 : vector<8x128xf32>, vector<8x128xf32>, vector<8x128xf32>, vector<8x128xf32>, vector<8x128xf32>, vector<8x128xf32>, vector<8x128xf32>, vector<8x128xf32>, vector<8x128xf32>, vector<8x128xf32>, vector<8x128xf32>, vector<8x128xf32>, vector<8x128xf32>, vector<8x128xf32>, vector<8x128xf32> -> vector<120x128xf32>
    %c0_31 = arith.constant 0 : index
    %c0_32 = arith.constant 0 : index
    %95 = vector.load %arg4[%c0_31, %c0_32] : memref<8x120xf32, #tpu.memory_space<vmem>>, vector<8x120xf32>
    %cst_33 = arith.constant dense<0.000000e+00> : vector<8x128xf32>
    %96 = tpu.matmul %95, %94, %cst_33 {dimension_numbers = #tpu.dot_dimension_numbers<[1], [0], [0], [1], [0, 0, 1, 1], [], []>} : vector<8x120xf32>, vector<120x128xf32>, vector<8x128xf32> -> vector<8x128xf32>
    %c0_34 = arith.constant 0 : index
    %c0_35 = arith.constant 0 : index
    %97 = vector.load %arg6[%c0_34, %c0_35] : memref<8x128xf32, #tpu.memory_space<vmem>>, vector<8x128xf32>
    %98 = arith.addf %96, %97 : vector<8x128xf32>
    %c0_36 = arith.constant 0 : index
    %c0_37 = arith.constant 0 : index
    %99 = vector.load %arg2[%c0_36, %c0_37] : memref<8x128xf32, #tpu.memory_space<vmem>>, vector<8x128xf32>
    %100 = arith.addf %98, %99 : vector<8x128xf32>
    %cst_38 = arith.constant 0.000000e+00 : f32
    %101 = vector.broadcast %cst_38 : f32 to vector<8x128xf32>
    %102 = arith.maximumf %100, %101 : vector<8x128xf32>
    %c0_39 = arith.constant 0 : index
    %c0_40 = arith.constant 0 : index
    %103 = vector.load %arg7[%c0_39, %c0_40] : memref<8x128xf32, #tpu.memory_space<vmem>>, vector<8x128xf32>
    tpu.vector_store %arg7[%c0_39, %c0_40], %102 {strides = array<i32>} : memref<8x128xf32, #tpu.memory_space<vmem>>, vector<8x128xf32>,
    return
  }
  func.func @transform_0(%arg0: i32) -> (i32, i32) {
    %c0_i32 = arith.constant 0 : i32
    %c0_i32_0 = arith.constant 0 : i32
    %c0_i32_1 = arith.constant 0 : i32
    return %c0_i32, %c0_i32_0 : i32, i32
  }
  func.func @transform_1(%arg0: i32) -> (i32, i32) {
    %c0_i32 = arith.constant 0 : i32
    %c0_i32_0 = arith.constant 0 : i32
    %c0_i32_1 = arith.constant 0 : i32
    return %c0_i32, %c0_i32_0 : i32, i32
  }
  func.func @transform_2(%arg0: i32) -> (i32, i32) {
    %c0_i32 = arith.constant 0 : i32
    %c0_i32_0 = arith.constant 0 : i32
    %c0_i32_1 = arith.constant 0 : i32
    return %c0_i32, %c0_i32_0 : i32, i32
  }
  func.func @transform_3(%arg0: i32) -> (i32, i32) {
    %c0_i32 = arith.constant 0 : i32
    %c0_i32_0 = arith.constant 0 : i32
    %c0_i32_1 = arith.constant 0 : i32
    return %c0_i32, %c0_i32_0 : i32, i32
  }
  func.func @transform_4(%arg0: i32) -> (i32, i32) {
    %c0_i32 = arith.constant 0 : i32
    %c0_i32_0 = arith.constant 0 : i32
    %c0_i32_1 = arith.constant 0 : i32
    return %c0_i32, %c0_i32_0 : i32, i32
  }
  func.func @transform_5(%arg0: i32) -> (i32, i32) {
    %c0_i32 = arith.constant 0 : i32
    %c0_i32_0 = arith.constant 0 : i32
    %c0_i32_1 = arith.constant 0 : i32
    return %c0_i32, %c0_i32_0 : i32, i32
  }
  func.func @transform_6(%arg0: i32) -> (i32, i32) {
    %c0_i32 = arith.constant 0 : i32
    %c0_i32_0 = arith.constant 0 : i32
    %c0_i32_1 = arith.constant 0 : i32
    return %c0_i32, %c0_i32_0 : i32, i32
  }
}

</mosaic_0001>

<llo_original>
// kernel: tpu_custom_call.1
$region0: #{tpu_custom_call.1}
  #allocation0 [shape = 'u32[]', space=smem, size = 0x4, offset = 0x4, fixed_abs, tag = 'smem constant byte address 0x4 - core index']
  #allocation1 [shape = 'u32[72,128]{1,0:T(1,128)}', space=vmem, size = 0x9000, scoped, tag = 'internal scratch']
  %s0 = inlined_call_operand.hbm [shape: f32[120,128], index: 0, kind: input, shape index: {}]
  %s1 = inlined_call_operand.hbm [shape: f32[8,128], index: 1, kind: input, shape index: {}]
  %s2 = inlined_call_operand.hbm [shape: f32[8,120], index: 2, kind: input, shape index: {}]
  %s3 = inlined_call_operand.hbm [shape: f32[8,120], index: 3, kind: input, shape index: {}]
  %s4 = inlined_call_operand.hbm [shape: f32[8,128], index: 4, kind: input, shape index: {}]
  %s5 = inlined_call_operand.hbm [shape: f32[8,128], index: 5, kind: input, shape index: {}]
  %s6 = inlined_call_operand.hbm [shape: f32[8,128], index: 6, kind: output, shape index: {}]
  %s7 = sld [smem:[#allocation0]]
  $region58: #{tpu_custom_call.1} parent=0
    _
  %s9 = ssub.s32 1, %s7
  %s10 = scalar_select 0, %s9, %s7
  $region1: #{tpu_custom_call.1} parent=0
    #allocation2 [shape = 'u8[61440]{0}', space=vmem, size = 0xf000, scoped, tag = 'input window, operand 0, single buffered']
    #allocation3 [shape = 's32[1]{0}', space=sflag, size = 0x4, scoped, tag = 'scoped memory for tpu_custom_call.1']
    #allocation4 [shape = 's32[1]{0}', space=sflag, size = 0x4, scoped, tag = 'scoped memory for tpu_custom_call.1']
    #allocation5 [shape = 'u8[4096]{0}', space=vmem, size = 0x1000, scoped, tag = 'input window, operand 1, single buffered']
    #allocation6 [shape = 's32[1]{0}', space=sflag, size = 0x4, scoped, tag = 'scoped memory for tpu_custom_call.1']
    #allocation7 [shape = 'u8[4096]{0}', space=vmem, size = 0x1000, scoped, tag = 'input window, operand 2, single buffered']
    #allocation8 [shape = 'u8[4096]{0}', space=vmem, size = 0x1000, scoped, tag = 'input window, operand 3, single buffered']
    #allocation9 [shape = 's32[1]{0}', space=sflag, size = 0x4, scoped, tag = 'scoped memory for tpu_custom_call.1']
    #allocation10 [shape = 'u8[4096]{0}', space=vmem, size = 0x1000, scoped, tag = 'input window, operand 4, single buffered']
    #allocation11 [shape = 'u8[4096]{0}', space=vmem, size = 0x1000, scoped, tag = 'input window, operand 5, single buffered']
    #allocation12 [shape = 's32[1]{0}', space=sflag, size = 0x4, scoped, tag = 'scoped memory for tpu_custom_call.1']
    #allocation13 [shape = 'u8[4096]{0}', space=vmem, size = 0x1000, scoped, tag = 'output window, operand 0, single buffered']
    %11 = vsyncpa [#allocation3], 0
    %12 = vsyncpa [#allocation6], 0
    %13 = vsyncpa [#allocation9], 0
    %14 = vsyncpa [#allocation12], 0
    %15 = vsyncpa [#allocation4], 0
    // Predicated region
    $region2: #{tpu_custom_call.1} parent=1 // pred_check
      _
    $region3: #{tpu_custom_call.1} parent=1 // pred_check_branch
      %17 = sbr.rel (0) target = $region5
    $region4: #{tpu_custom_call.1} parent=1 // pred_region
      %19 = vsyncadd [#allocation3], 0
      %s20 = sshll.u32 %s0, 4
      %s21 = int_to_ptr.hbm [resolvable:$true] %s20
      %s22 = sshll.u32 [#allocation2], 4
      %s23 = int_to_ptr.vmem [resolvable:$true] %s22
      %28 = dma.hbm_to_vmem [thread:$0]  %s21, 1920, %s23, [#allocation3], 128, 128, 8
    $region5: #{tpu_custom_call.1} parent=1 // pred_fallthru
      _
    // Predicated region
    $region6: #{tpu_custom_call.1} parent=1 // pred_check
      _
    $region7: #{tpu_custom_call.1} parent=1 // pred_check_branch
      %30 = sbr.rel (0) target = $region9
    $region8: #{tpu_custom_call.1} parent=1 // pred_region
      %32 = vsyncadd [#allocation6], 0
      %s34 = sshll.u32 %s1, 4
      %s35 = int_to_ptr.hbm [resolvable:$true] %s34
      %s36 = sshll.u32 [#allocation5], 4
      %s37 = int_to_ptr.vmem [resolvable:$true] %s36
      %39 = dma.hbm_to_vmem [thread:$0]  %s35, 128, %s37, [#allocation6]
    $region9: #{tpu_custom_call.1} parent=1 // pred_fallthru
      _
    // Predicated region
    $region10: #{tpu_custom_call.1} parent=1 // pred_check
      _
    $region11: #{tpu_custom_call.1} parent=1 // pred_check_branch
      %41 = sbr.rel (0) target = $region13
    $region12: #{tpu_custom_call.1} parent=1 // pred_region
      %43 = vsyncadd [#allocation6], 0
      %s45 = sshll.u32 %s2, 4
      %s46 = int_to_ptr.hbm [resolvable:$true] %s45
      %s47 = sshll.u32 [#allocation7], 4
      %s48 = int_to_ptr.vmem [resolvable:$true] %s47
      %50 = dma.hbm_to_vmem [thread:$0]  %s46, 128, %s48, [#allocation6]
    $region13: #{tpu_custom_call.1} parent=1 // pred_fallthru
      _
    // Predicated region
    $region14: #{tpu_custom_call.1} parent=1 // pred_check
      _
    $region15: #{tpu_custom_call.1} parent=1 // pred_check_branch
      %52 = sbr.rel (0) target = $region17
    $region16: #{tpu_custom_call.1} parent=1 // pred_region
      %54 = vsyncadd [#allocation9], 0
      %s56 = sshll.u32 %s3, 4
      %s57 = int_to_ptr.hbm [resolvable:$true] %s56
      %s58 = sshll.u32 [#allocation8], 4
      %s59 = int_to_ptr.vmem [resolvable:$true] %s58
      %61 = dma.hbm_to_vmem [thread:$0]  %s57, 128, %s59, [#allocation9]
    $region17: #{tpu_custom_call.1} parent=1 // pred_fallthru
      _
    // Predicated region
    $region18: #{tpu_custom_call.1} parent=1 // pred_check
      _
    $region19: #{tpu_custom_call.1} parent=1 // pred_check_branch
      %63 = sbr.rel (0) target = $region21
    $region20: #{tpu_custom_call.1} parent=1 // pred_region
      %65 = vsyncadd [#allocation9], 0
      %s67 = sshll.u32 %s4, 4
      %s68 = int_to_ptr.hbm [resolvable:$true] %s67
      %s69 = sshll.u32 [#allocation10], 4
      %s70 = int_to_ptr.vmem [resolvable:$true] %s69
      %72 = dma.hbm_to_vmem [thread:$0]  %s68, 128, %s70, [#allocation9]
    $region21: #{tpu_custom_call.1} parent=1 // pred_fallthru
      _
    // Predicated region
    $region22: #{tpu_custom_call.1} parent=1 // pred_check
      _
    $region23: #{tpu_custom_call.1} parent=1 // pred_check_branch
      %74 = sbr.rel (0) target = $region25
    $region24: #{tpu_custom_call.1} parent=1 // pred_region
      %76 = vsyncadd [#allocation12], 0
      %s78 = sshll.u32 %s5, 4
      %s79 = int_to_ptr.hbm [resolvable:$true] %s78
      %s80 = sshll.u32 [#allocation11], 4
      %s81 = int_to_ptr.vmem [resolvable:$true] %s80
      %83 = dma.hbm_to_vmem [thread:$0]  %s79, 128, %s81, [#allocation12]
    $region25: #{tpu_custom_call.1} parent=1 // pred_fallthru
      _
    // Predicated region
    $region26: #{tpu_custom_call.1} parent=1 // pred_check
      _
    $region27: #{tpu_custom_call.1} parent=1 // pred_check_branch
      %85 = sbr.rel (0) target = $region29
    $region28: #{tpu_custom_call.1} parent=1 // pred_region
      %87 = dma.done [#allocation3], 1920
    $region29: #{tpu_custom_call.1} parent=1 // pred_fallthru
      _
    // Predicated region
    $region30: #{tpu_custom_call.1} parent=1 // pred_check
      _
    $region31: #{tpu_custom_call.1} parent=1 // pred_check_branch
      %89 = sbr.rel (0) target = $region33
    $region32: #{tpu_custom_call.1} parent=1 // pred_region
      %91 = dma.done [#allocation6], 128
    $region33: #{tpu_custom_call.1} parent=1 // pred_fallthru
      _
    // Predicated region
    $region34: #{tpu_custom_call.1} parent=1 // pred_check
      _
    $region35: #{tpu_custom_call.1} parent=1 // pred_check_branch
      %93 = sbr.rel (0) target = $region37
    $region36: #{tpu_custom_call.1} parent=1 // pred_region
      %95 = dma.done [#allocation6], 128
    $region37: #{tpu_custom_call.1} parent=1 // pred_fallthru
      _
    // Predicated region
    $region38: #{tpu_custom_call.1} parent=1 // pred_check
      _
    $region39: #{tpu_custom_call.1} parent=1 // pred_check_branch
      %97 = sbr.rel (0) target = $region41
    $region40: #{tpu_custom_call.1} parent=1 // pred_region
      %99 = dma.done [#allocation9], 128
    $region41: #{tpu_custom_call.1} parent=1 // pred_fallthru
      _
    // Predicated region
    $region42: #{tpu_custom_call.1} parent=1 // pred_check
      _
    $region43: #{tpu_custom_call.1} parent=1 // pred_check_branch
      %101 = sbr.rel (0) target = $region45
    $region44: #{tpu_custom_call.1} parent=1 // pred_region
      %103 = dma.done [#allocation9], 128
    $region45: #{tpu_custom_call.1} parent=1 // pred_fallthru
      _
    // Predicated region
    $region46: #{tpu_custom_call.1} parent=1 // pred_check
      _
    $region47: #{tpu_custom_call.1} parent=1 // pred_check_branch
      %105 = sbr.rel (0) target = $region49
    $region48: #{tpu_custom_call.1} parent=1 // pred_region
      %107 = dma.done [#allocation12], 128
    $region49: #{tpu_custom_call.1} parent=1 // pred_fallthru
      _
    %v108 = vld [vmem:[#allocation7] sm:$0xff]
    %v109 = vld [vmem:[#allocation2] sm:$0xff]
    %v110 = vld [vmem:[#allocation2 + $0x8] sm:$0xff]
    %v111 = vld [vmem:[#allocation2 + $0x10] sm:$0xff]
    %v112 = vld [vmem:[#allocation2 + $0x18] sm:$0xff]
    %v113 = vld [vmem:[#allocation2 + $0x20] sm:$0xff]
    %v114 = vld [vmem:[#allocation2 + $0x28] sm:$0xff]
    %v115 = vld [vmem:[#allocation2 + $0x30] sm:$0xff]
    %v116 = vld [vmem:[#allocation2 + $0x38] sm:$0xff]
    %v117 = vld [vmem:[#allocation2 + $0x40] sm:$0xff]
    %v118 = vld [vmem:[#allocation2 + $0x48] sm:$0xff]
    %v119 = vld [vmem:[#allocation2 + $0x50] sm:$0xff]
    %v120 = vld [vmem:[#allocation2 + $0x58] sm:$0xff]
    %v121 = vld [vmem:[#allocation2 + $0x60] sm:$0xff]
    %v122 = vld [vmem:[#allocation2 + $0x68] sm:$0xff]
    %v123 = vld [vmem:[#allocation2 + $0x70] sm:$0xff]
    %v124 = vld [vmem:[#allocation10] sm:$0xff]
    %vm125 = vcmask 982016
    %v127 = vsel %vm125, %v108, 0
    %129 = vmatpush.msra.mxu0 0.0
    %130 = vmatpush.msra.mxu0 %v123
    %131 = vmatpush.msra.mxu0 %v122
    %132 = vmatpush.msra.mxu0 %v121
    %133 = vmatpush.msra.mxu0 %v120
    %134 = vmatpush.msra.mxu0 %v119
    %135 = vmatpush.msra.mxu0 %v118
    %136 = vmatpush.msra.mxu0 %v117
    %137 = vmatpush.msra.mxu0 %v116
    %138 = vmatpush.msra.mxu0 %v115
    %139 = vmatpush.msra.mxu0 %v114
    %140 = vmatpush.msra.mxu0 %v113
    %141 = vmatpush.msra.mxu0 %v112
    %142 = vmatpush.msra.mxu0 %v111
    %143 = vmatpush.msra.mxu0 %v110
    %144 = vmatpush.msra.mxu0 %v109
    %145 = vmatmul.f32.gmra.mxu0 %v127
    %v146 = vpop.f32.mrf.mxu0
    %v147 = vadd.f32 %v124, %v146
    %148 = vdwg.mxu0
    %v149 = vmax.f32 %v147, 0.0
    %v150 = vlaneseq
    %v151 = vand.u32 %v150, 127
    %vm152 = vcmp.lt.s32.totalorder %v151, 0
    %v153 = vsub.s32 0, %v151
    %v154 = vsel %vm152, %v153, %v151
    %v155 = vshrl.u32 %v154, 6
    %v156 = vand.u32 %v154, 63
    %v157 = vsub.s32 0, %v156
    %v158 = vsel %vm152, %v157, %v156
    %vm159 = vcmp.ne.s32.totalorder %v158, 0
    %vm160 = vcmp.lt.s32.totalorder %v158, 0
    %vm161 = vmand %vm160, %vm159
    %v162 = vadd.s32 %v158, 64
    %v163 = vsel %vm161, %v162, %v158
    %164 = vrot.lane.b32.xlu0 %v149, 7
    %v165 = vpop.permute.xlu0 %164
    %vm166 = vcmp.ge.s32.totalorder %v163, 7
    %v167 = vsel %vm166, %v165, 0.0
    %168 = vrot.lane.b32.xlu0 %v149, 6
    %v169 = vpop.permute.xlu0 %168
    %vm170 = vcmp.ge.s32.totalorder %v163, 6
    %v171 = vsel %vm170, %v169, 0.0
    %172 = vrot.lane.b32.xlu0 %v149, 5
    %v173 = vpop.permute.xlu0 %172
    %vm174 = vcmp.ge.s32.totalorder %v163, 5
    %v175 = vsel %vm174, %v173, 0.0
    %176 = vrot.lane.b32.xlu0 %v149, 4
    %v177 = vpop.permute.xlu0 %176
    %vm178 = vcmp.ge.s32.totalorder %v163, 4
    %v179 = vsel %vm178, %v177, 0.0
    %180 = vrot.lane.b32.xlu0 %v149, 3
    %v181 = vpop.permute.xlu0 %180
    %vm182 = vcmp.ge.s32.totalorder %v163, 3
    %v183 = vsel %vm182, %v181, 0.0
    %184 = vrot.lane.b32.xlu0 %v149, 2
    %v185 = vpop.permute.xlu0 %184
    %vm186 = vcmp.ge.s32.totalorder %v163, 2
    %v187 = vsel %vm186, %v185, 0.0
    %188 = vrot.lane.b32.xlu0 %v149, 1
    %v189 = vpop.permute.xlu0 %188
    %vm190 = vcmp.ge.s32.totalorder %v163, 1
    %v191 = vsel %vm190, %v189, 0.0
    %192 = vrot.lane.b32.xlu0 %v149, 127
    %v193 = vpop.permute.xlu0 %192
    %vm194 = vcmp.lt.s32.totalorder %v163, 63
    %v195 = vsel %vm194, %v193, 0.0
    %196 = vrot.lane.b32.xlu0 %v149, 126
    %v197 = vpop.permute.xlu0 %196
    %vm198 = vcmp.lt.s32.totalorder %v163, 62
    %v199 = vsel %vm198, %v197, 0.0
    %200 = vrot.lane.b32.xlu0 %v149, 125
    %v201 = vpop.permute.xlu0 %200
    %vm202 = vcmp.lt.s32.totalorder %v163, 61
    %v203 = vsel %vm202, %v201, 0.0
    %204 = vrot.lane.b32.xlu0 %v149, 124
    %v205 = vpop.permute.xlu0 %204
    %vm206 = vcmp.lt.s32.totalorder %v163, 60
    %v207 = vsel %vm206, %v205, 0.0
    %208 = vrot.lane.b32.xlu0 %v149, 123
    %v209 = vpop.permute.xlu0 %208
    %vm210 = vcmp.lt.s32.totalorder %v163, 59
    %v211 = vsel %vm210, %v209, 0.0
    %212 = vrot.lane.b32.xlu0 %v149, 122
    %v213 = vpop.permute.xlu0 %212
    %vm214 = vcmp.lt.s32.totalorder %v163, 58
    %v215 = vsel %vm214, %v213, 0.0
    %216 = vrot.lane.b32.xlu0 %v149, 121
    %v217 = vpop.permute.xlu0 %216
    %vm218 = vcmp.lt.s32.totalorder %v163, 57
    %v219 = vsel %vm218, %v217, 0.0
    %v220 = vld [vmem:[#allocation8] sm:$0xff]
    %v221 = vld [vmem:[#allocation11] sm:$0xff]
    %v223 = vsel %vm125, %v220, 0
    %225 = vmatpush.msra.mxu0 0.0
    %226 = vmatpush.msra.mxu0 %v219
    %227 = vmatpush.msra.mxu0 %v215
    %228 = vmatpush.msra.mxu0 %v211
    %229 = vmatpush.msra.mxu0 %v207
    %230 = vmatpush.msra.mxu0 %v203
    %231 = vmatpush.msra.mxu0 %v199
    %232 = vmatpush.msra.mxu0 %v195
    %233 = vmatpush.msra.mxu0 %v149
    %234 = vmatpush.msra.mxu0 %v191
    %235 = vmatpush.msra.mxu0 %v187
    %236 = vmatpush.msra.mxu0 %v183
    %237 = vmatpush.msra.mxu0 %v179
    %238 = vmatpush.msra.mxu0 %v175
    %239 = vmatpush.msra.mxu0 %v171
    %240 = vmatpush.msra.mxu0 %v167
    %241 = vmatmul.f32.gmra.mxu0 %v223
    %v242 = vpop.f32.mrf.mxu0
    %v243 = vadd.f32 %v221, %v242
    %244 = vdwg.mxu0
    %v245 = vld [vmem:[#allocation5] sm:$0xff]
    %v246 = vadd.f32 %v243, %v245
    %v247 = vmax.f32 %v246, 0.0
    %248 = vst [vmem:[#allocation13] sm:$0xff] %v247
    // Predicated region
    $region50: #{tpu_custom_call.1} parent=1 // pred_check
      _
    $region51: #{tpu_custom_call.1} parent=1 // pred_check_branch
      %250 = sbr.rel (0) target = $region53
    $region52: #{tpu_custom_call.1} parent=1 // pred_region
      %252 = vsyncadd [#allocation4], 0
      %s254 = sshll.u32 [#allocation13], 4
      %s255 = int_to_ptr.vmem [resolvable:$true] %s254
      %s256 = sshll.u32 %s6, 4
      %s257 = int_to_ptr.hbm [resolvable:$true] %s256
      %259 = dma.vmem_to_hbm [thread:$0]  %s255, 128, %s257, [#allocation4]
    $region53: #{tpu_custom_call.1} parent=1 // pred_fallthru
      _
    // Predicated region
    $region54: #{tpu_custom_call.1} parent=1 // pred_check
      _
    $region55: #{tpu_custom_call.1} parent=1 // pred_check_branch
      %261 = sbr.rel (0) target = $region57
    $region56: #{tpu_custom_call.1} parent=1 // pred_region
      %263 = dma.done [#allocation4], 128
    $region57: #{tpu_custom_call.1} parent=1 // pred_fallthru
      _
    %264 = vsyncpa [#allocation3], 1
    %265 = vsyncpa [#allocation6], 1
    %266 = vsyncpa [#allocation9], 1
    %267 = vsyncpa [#allocation12], 1
    %268 = vsyncpa [#allocation4], 1

</llo_original>
